<compile_context>
chip_gen: v6e
topology: v6e:2x2x1
jax: 0.10.0
libtpu: 0.0.40
codegen_flags: <defaults>
</compile_context>

<pallas_src>
import jax
import jax.numpy as jnp
from jax.experimental import pallas as pl
from jax.experimental.pallas import tpu as pltpu

Ns = 11          # Hopper-v3 observation dim
Na = 3           # Hopper-v3 action dim
HID = 256        # fc1/fc2 width
KIN = Ns + Na    # 14
KPAD = 16        # fc1 input dim padded to a sublane multiple (14 data + 1 bias + 1 zero)


def critic_kernel(b3_ref,      # SMEM (1,)        f32   fc3.bias
                  xa_ref,      # VMEM (KPAD, TB)  bf16  [x, a, 1, 0]^T batch tile
                  w1_ref,      # VMEM (HID, KPAD) bf16  [fc1.weight | fc1.bias | 0]
                  w2_ref,      # VMEM (HID, HID)  bf16  fc2.weight (torch layout)
                  b2_ref,      # VMEM (HID, 1)    bf16  fc2.bias
                  w3_ref,      # VMEM (8, HID)    bf16  fc3.weight in row 0
                  o_ref):      # VMEM (1, TB)     f32   q for this batch tile
    # fc1 (+ folded bias) and ReLU.  MXU, bf16 operands, f32 accumulation.
    h1 = jnp.dot(w1_ref[...], xa_ref[...], preferred_element_type=jnp.float32)
    h1 = jnp.maximum(h1.astype(jnp.bfloat16), 0.0)               # (HID, TB) bf16
    # fc2 + bias + ReLU (bias add / ReLU in bf16: VALU is the binding slot at
    # large TB on v6e/v7x and is bf16-capable there).
    h2 = jnp.dot(w2_ref[...], h1, preferred_element_type=jnp.float32)
    h2 = jnp.maximum(h2.astype(jnp.bfloat16) + b2_ref[...], 0.0)  # (HID, TB) bf16
    # fc3 on the MXU: (8, HID) @ (HID, TB); only row 0 carries the real weight.
    q = jnp.dot(w3_ref[...], h2, preferred_element_type=jnp.float32)
    o_ref[...] = q[0:1, :] + b3_ref[0]                            # (1, TB) f32


def _pick_tile(batch, tb_max):
    """Batch tile: multiple of 256, capped at tb_max, and >= 2 tiles whenever
    the batch allows (so v7x megacore sharding along the parallel axis works)."""
    half = 256 * pl.cdiv(batch, 2 * 256)       # smallest multiple of 256 >= B/2
    return max(256, min(tb_max, half))


def critic_forward(x, a, kp, *, tb=2048):
    """x: (B, Ns) f32, a: (B, Na) f32, kp: pack_params output -> (B,) f32."""
    B = x.shape[0]
    tile = _pick_tile(B, tb)
    nt = pl.cdiv(B, tile)
    Bp = nt * tile

    # cat([x, a], 1), append the bias-fold 1.0 column and one zero column
    # (14 -> 16 features), zero-pad the batch to Bp, transpose to
    # (features, batch), cast to bf16.  One fused XLA pass; at small B the
    # dispatch of this fusion (not the kernel) dominates end-to-end time.
    xa = jnp.concatenate(
        [x, a,
         jnp.ones((B, 1), jnp.float32),                 # multiplies folded b1
         jnp.zeros((B, KPAD - KIN - 1), jnp.float32)], axis=1)
    xa = jnp.pad(xa, ((0, Bp - B), (0, 0)))
    xa_t = xa.T.astype(jnp.bfloat16)                    # (KPAD, Bp)

    # Constant index_map => weights/biases stay VMEM-resident across grid steps
    # (which is also why bytes_accessed below counts them exactly once).
    resident = lambda shape: pl.BlockSpec(shape, lambda i: (0, 0))

    flops = 2 * Bp * (KPAD * HID + HID * HID + HID)
    bytes_accessed = (xa_t.size * 2 + kp["w1"].size * 2 + kp["w2"].size * 2
                      + kp["b2"].size * 2 + kp["w3"].size * 2 + 4 + Bp * 4)

    out = pl.pallas_call(
        critic_kernel,
        out_shape=jax.ShapeDtypeStruct((1, Bp), jnp.float32),
        grid=(nt,),
        in_specs=[
            pl.BlockSpec(memory_space=pltpu.MemorySpace.SMEM),  # b3 scalar
            pl.BlockSpec((KPAD, tile), lambda i: (0, i)),       # xa batch tile
            resident((HID, KPAD)),                              # w1 (+ folded b1)
            resident((HID, HID)),                               # w2
            resident((HID, 1)),                                 # b2
            resident((8, HID)),                                 # w3 (row 0)
        ],
        out_specs=pl.BlockSpec((1, tile), lambda i: (0, i)),    # lane-dense q
        compiler_params=pltpu.CompilerParams(
            dimension_semantics=("parallel",),
            vmem_limit_bytes=32 * 1024 * 1024),
        cost_estimate=pl.CostEstimate(flops=flops, transcendentals=0,
                                      bytes_accessed=bytes_accessed),
    )(kp["b3"], xa_t, kp["w1"], kp["w2"], kp["b2"], kp["w3"])

    return out.reshape(-1)[:B]                                  # matches reshape([-1])


# ---------------------------------------------------------------------------
# Parameter init (torch nn.Linear layout + default init) and packing.
# ---------------------------------------------------------------------------
def init_linear(key, fan_in, fan_out):
    """PyTorch nn.Linear default init, torch layout: W (out, in), b (out,)."""
    kw, kb = jax.random.split(key)
    bound = 1.0 / jnp.sqrt(jnp.float32(fan_in))
    w = jax.random.uniform(kw, (fan_out, fan_in), jnp.float32, -bound, bound)
    b = jax.random.uniform(kb, (fan_out,), jnp.float32, -bound, bound)
    return w, b


def init_params(key):
    keys = jax.random.split(key, 6)
    w1, b1 = init_linear(keys[0], KIN, HID)
    w2, b2 = init_linear(keys[1], HID, HID)
    w3, b3 = init_linear(keys[2], HID, 1)
    # fc4/fc5/fc6 exist in __init__ but are unused by forward(); init for fidelity.
    w4, b4 = init_linear(keys[3], KIN, HID)
    w5, b5 = init_linear(keys[4], HID, HID)
    w6, b6 = init_linear(keys[5], HID, 1)
    return dict(w1=w1, b1=b1, w2=w2, b2=b2, w3=w3, b3=b3,
                w4=w4, b4=b4, w5=w5, b5=b5, w6=w6, b6=b6)


def pack_params(p):
    """Torch-layout f32 params -> kernel-ready (padded / bf16 / folded) params."""
    # fc1: pad K 14 -> 16 and fold b1 into column 14 (xa feature 14 is set to 1).
    w1p = (jnp.zeros((HID, KPAD), jnp.float32)
           .at[:, :KIN].set(p["w1"])
           .at[:, KIN].set(p["b1"]))
    # fc3: weight row padded to 8 sublanes for a clean (8, HID) @ (HID, TB) dot.
    w3p = jnp.zeros((8, HID), jnp.float32).at[0, :].set(p["w3"][0])
    return dict(
        w1=w1p.astype(jnp.bfloat16),                   # (HID, KPAD) bf16
        w2=p["w2"].astype(jnp.bfloat16),               # (HID, HID)  bf16
        b2=p["b2"].reshape(HID, 1).astype(jnp.bfloat16),  # (HID, 1) bf16
        w3=w3p.astype(jnp.bfloat16),                   # (8, HID)    bf16
        b3=p["b3"].reshape(1),                         # (1,)        f32 (SMEM)
    )


def reference_forward(x, a, p):
    """Pure-f32 JAX reference matching the torch module."""
    xa = jnp.concatenate([x, a], axis=1)
    h = jnp.maximum(xa @ p["w1"].T + p["b1"], 0.0)
    h = jnp.maximum(h @ p["w2"].T + p["b2"], 0.0)
    return (h @ p["w3"].T + p["b3"]).reshape(-1)


if __name__ == "__main__":
    key = jax.random.PRNGKey(0)
    kparam, kx, ka = jax.random.split(key, 3)
    params = init_params(kparam)
    kparams = pack_params(params)

    fwd = jax.jit(critic_forward)

    # Single small tile, a two-tile case with batch padding, and a multi-tile
    # large-tile case (tile = 2048, nt = 2).
    for B in (8, 300, 4096):
        kxb, kab = jax.random.split(jax.random.fold_in(kx, B))
        x = jax.random.normal(kxb, (B, Ns), jnp.float32)
        a = jax.random.normal(kab, (B, Na), jnp.float32)

        q = jax.block_until_ready(fwd(x, a, kparams))
        q_ref = reference_forward(x, a, params)

        assert q.shape == (B,), q.shape
        # bf16 weights/activations (incl. folded b1, bf16 epilogue, bf16 fc3)
        # with f32 accumulation vs. a pure-f32 reference.
        assert jnp.allclose(q, q_ref, atol=3e-2, rtol=3e-2), (
            float(jnp.max(jnp.abs(q - q_ref))))

    print("KERNEL_OK")
</pallas_src>

<mosaic_0001>
module attributes {stable_mosaic.version = 11 : i64} {
  func.func @critic_kernel(%arg0: i32, %arg1: memref<1xf32, #tpu.memory_space<smem>>, %arg2: memref<16x256xbf16, #tpu.memory_space<vmem>>, %arg3: memref<256x16xbf16, #tpu.memory_space<vmem>>, %arg4: memref<256x256xbf16, #tpu.memory_space<vmem>>, %arg5: memref<256x1xbf16, #tpu.memory_space<vmem>>, %arg6: memref<8x256xbf16, #tpu.memory_space<vmem>>, %arg7: memref<1x256xf32, #tpu.memory_space<vmem>>) attributes {dimension_semantics = [#tpu.dimension_semantics<parallel>], iteration_bounds = array<i64: 1>, scalar_prefetch = 0 : i64, scratch_operands = 0 : i64, tpu.core_type = #tpu.core_type<tc>, window_params = [{transform_indices = @transform_0, window_bounds = array<i64: 1>}, {transform_indices = @transform_1, window_bounds = array<i64: 16, 256>}, {pipeline_mode = #tpu.pipeline_mode<synchronous>, transform_indices = @transform_2, window_bounds = array<i64: 256, 16>}, {pipeline_mode = #tpu.pipeline_mode<synchronous>, transform_indices = @transform_3, window_bounds = array<i64: 256, 256>}, {pipeline_mode = #tpu.pipeline_mode<synchronous>, transform_indices = @transform_4, window_bounds = array<i64: 256, 1>}, {pipeline_mode = #tpu.pipeline_mode<synchronous>, transform_indices = @transform_5, window_bounds = array<i64: 8, 256>}, {transform_indices = @transform_6, window_bounds = array<i64: 1, 256>}]} {
    %c0 = arith.constant 0 : index
    %c0_0 = arith.constant 0 : index
    %0 = vector.load %arg3[%c0, %c0_0] : memref<256x16xbf16, #tpu.memory_space<vmem>>, vector<256x16xbf16>
    %c0_1 = arith.constant 0 : index
    %c0_2 = arith.constant 0 : index
    %1 = vector.load %arg2[%c0_1, %c0_2] : memref<16x256xbf16, #tpu.memory_space<vmem>>, vector<16x256xbf16>
    %cst = arith.constant dense<0.000000e+00> : vector<256x256xf32>
    %2 = tpu.matmul %0, %1, %cst {dimension_numbers = #tpu.dot_dimension_numbers<[1], [0], [0], [1], [0, 0, 1, 1], [], []>} : vector<256x16xbf16>, vector<16x256xbf16>, vector<256x256xf32> -> vector<256x256xf32>
    %3 = arith.truncf %2 : vector<256x256xf32> to vector<256x256xbf16>
    %cst_3 = arith.constant 0.000000e+00 : bf16
    %4 = vector.broadcast %cst_3 : bf16 to vector<256x256xbf16>
    %5 = arith.maximumf %3, %4 : vector<256x256xbf16>
    %c0_4 = arith.constant 0 : index
    %c0_5 = arith.constant 0 : index
    %6 = vector.load %arg4[%c0_4, %c0_5] : memref<256x256xbf16, #tpu.memory_space<vmem>>, vector<256x256xbf16>
    %cst_6 = arith.constant dense<0.000000e+00> : vector<256x256xf32>
    %7 = tpu.matmul %6, %5, %cst_6 {dimension_numbers = #tpu.dot_dimension_numbers<[1], [0], [0], [1], [0, 0, 1, 1], [], []>} : vector<256x256xbf16>, vector<256x256xbf16>, vector<256x256xf32> -> vector<256x256xf32>
    %8 = arith.truncf %7 : vector<256x256xf32> to vector<256x256xbf16>
    %c0_7 = arith.constant 0 : index
    %c0_8 = arith.constant 0 : index
    %9 = vector.load %arg5[%c0_7, %c0_8] : memref<256x1xbf16, #tpu.memory_space<vmem>>, vector<256x1xbf16>
    %10 = vector.broadcast %9 : vector<256x1xbf16> to vector<256x256xbf16>
    %11 = arith.addf %8, %10 : vector<256x256xbf16>
    %cst_9 = arith.constant 0.000000e+00 : bf16
    %12 = vector.broadcast %cst_9 : bf16 to vector<256x256xbf16>
    %13 = arith.maximumf %11, %12 : vector<256x256xbf16>
    %c0_10 = arith.constant 0 : index
    %c0_11 = arith.constant 0 : index
    %14 = vector.load %arg6[%c0_10, %c0_11] : memref<8x256xbf16, #tpu.memory_space<vmem>>, vector<8x256xbf16>
    %cst_12 = arith.constant dense<0.000000e+00> : vector<8x256xf32>
    %15 = tpu.matmul %14, %13, %cst_12 {dimension_numbers = #tpu.dot_dimension_numbers<[1], [0], [0], [1], [0, 0, 1, 1], [], []>} : vector<8x256xbf16>, vector<256x256xbf16>, vector<8x256xf32> -> vector<8x256xf32>
    %16 = vector.extract_strided_slice %15 {offsets = [0, 0], sizes = [1, 256], strides = [1, 1]} : vector<8x256xf32> to vector<1x256xf32>
    %c0_13 = arith.constant 0 : index
    %17 = memref.load %arg1[%c0_13] : memref<1xf32, #tpu.memory_space<smem>>
    %18 = vector.broadcast %17 : f32 to vector<1x256xf32>
    %19 = arith.addf %16, %18 : vector<1x256xf32>
    %c0_14 = arith.constant 0 : index
    %c0_15 = arith.constant 0 : index
    %20 = vector.load %arg7[%c0_14, %c0_15] : memref<1x256xf32, #tpu.memory_space<vmem>>, vector<1x256xf32>
    tpu.vector_store %arg7[%c0_14, %c0_15], %19 {strides = array<i32>} : memref<1x256xf32, #tpu.memory_space<vmem>>, vector<1x256xf32>,
    return
  }
  func.func @transform_0(%arg0: i32) -> i32 {
    %c0_i32 = arith.constant 0 : i32
    %c0_i32_0 = arith.constant 0 : i32
    return %c0_i32 : i32
  }
  func.func @transform_1(%arg0: i32) -> (i32, i32) {
    %c0_i32 = arith.constant 0 : i32
    %c0_i32_0 = arith.constant 0 : i32
    return %c0_i32, %arg0 : i32, i32
  }
  func.func @transform_2(%arg0: i32) -> (i32, i32) {
    %c0_i32 = arith.constant 0 : i32
    %c0_i32_0 = arith.constant 0 : i32
    %c0_i32_1 = arith.constant 0 : i32
    return %c0_i32, %c0_i32_0 : i32, i32
  }
  func.func @transform_3(%arg0: i32) -> (i32, i32) {
    %c0_i32 = arith.constant 0 : i32
    %c0_i32_0 = arith.constant 0 : i32
    %c0_i32_1 = arith.constant 0 : i32
    return %c0_i32, %c0_i32_0 : i32, i32
  }
  func.func @transform_4(%arg0: i32) -> (i32, i32) {
    %c0_i32 = arith.constant 0 : i32
    %c0_i32_0 = arith.constant 0 : i32
    %c0_i32_1 = arith.constant 0 : i32
    return %c0_i32, %c0_i32_0 : i32, i32
  }
  func.func @transform_5(%arg0: i32) -> (i32, i32) {
    %c0_i32 = arith.constant 0 : i32
    %c0_i32_0 = arith.constant 0 : i32
    %c0_i32_1 = arith.constant 0 : i32
    return %c0_i32, %c0_i32_0 : i32, i32
  }
  func.func @transform_6(%arg0: i32) -> (i32, i32) {
    %c0_i32 = arith.constant 0 : i32
    %c0_i32_0 = arith.constant 0 : i32
    return %c0_i32, %arg0 : i32, i32
  }
}

</mosaic_0001>

<llo_original>
// kernel: critic_forward.1
$region0: #{critic_forward.1}
  #allocation0 [shape = 'u32[]', space=smem, size = 0x4, offset = 0x4, fixed_abs, tag = 'smem constant byte address 0x4 - core index']
  #allocation1 [shape = 'u32[144,128]{1,0:T(1,128)}', space=vmem, size = 0x12000, scoped, tag = 'internal scratch']
  #allocation2 [shape = 'f32[1]{0:T(128)S(6)}', space=smem, size = 0x200, scoped, tag = 'scoped memory for critic_forward.1']
  %s0 = inlined_call_operand.<no memory space> [shape: f32[1], index: 0, kind: input, shape index: {}]
  %s1 = inlined_call_operand.vmem [shape: bf16[16,256], index: 1, kind: input, shape index: {}]
  %s2 = inlined_call_operand.vmem [shape: bf16[256,16], index: 2, kind: input, shape index: {}]
  %s3 = inlined_call_operand.vmem [shape: bf16[256,256], index: 3, kind: input, shape index: {}]
  %s4 = inlined_call_operand.vmem [shape: bf16[256,1], index: 4, kind: input, shape index: {}]
  %s5 = inlined_call_operand.vmem [shape: bf16[8,256], index: 5, kind: input, shape index: {}]
  %s6 = inlined_call_operand.vmem [shape: f32[1,256], index: 6, kind: output, shape index: {}]
  %s7 = sld [smem:[#allocation0]]
  $region34: #{critic_forward.1} parent=0
    _
  %s9 = ssub.s32 1, %s7
  %s10 = scalar_select 0, %s9, %s7
  %11 = sst [smem:[#allocation2]] %s0
  // Predicated region
  $region2: #{critic_forward.1} parent=0 // pred_check
    _
  $region3: #{critic_forward.1} parent=0 // pred_check_branch
    %13 = sbr.rel (0) target = $region5
  $region4: #{critic_forward.1} parent=0 // pred_region
    _
  $region5: #{critic_forward.1} parent=0 // pred_fallthru
    _
  // Predicated region
  $region6: #{critic_forward.1} parent=0 // pred_check
    _
  $region7: #{critic_forward.1} parent=0 // pred_check_branch
    %15 = sbr.rel (0) target = $region9
  $region8: #{critic_forward.1} parent=0 // pred_region
    _
  $region9: #{critic_forward.1} parent=0 // pred_fallthru
    _
  // Predicated region
  $region10: #{critic_forward.1} parent=0 // pred_check
    _
  $region11: #{critic_forward.1} parent=0 // pred_check_branch
    %17 = sbr.rel (0) target = $region13
  $region12: #{critic_forward.1} parent=0 // pred_region
    _
  $region13: #{critic_forward.1} parent=0 // pred_fallthru
    _
  // Predicated region
  $region14: #{critic_forward.1} parent=0 // pred_check
    _
  $region15: #{critic_forward.1} parent=0 // pred_check_branch
    %19 = sbr.rel (0) target = $region17
  $region16: #{critic_forward.1} parent=0 // pred_region
    _
  $region17: #{critic_forward.1} parent=0 // pred_fallthru
    _
  // Predicated region
  $region18: #{critic_forward.1} parent=0 // pred_check
    _
  $region19: #{critic_forward.1} parent=0 // pred_check_branch
    %21 = sbr.rel (0) target = $region21
  $region20: #{critic_forward.1} parent=0 // pred_region
    _
  $region21: #{critic_forward.1} parent=0 // pred_fallthru
    _
  // Predicated region
  $region22: #{critic_forward.1} parent=0 // pred_check
    _
  $region23: #{critic_forward.1} parent=0 // pred_check_branch
    %23 = sbr.rel (0) target = $region25
  $region24: #{critic_forward.1} parent=0 // pred_region
    _
  $region25: #{critic_forward.1} parent=0 // pred_fallthru
    _
  %v25 = vld [vmem:[%s2] sm:$0xf]
  %v26 = vld [vmem:[%s2 + $0x4] sm:$0xf]
  %v27 = vld [vmem:[%s2 + $0x8] sm:$0xf]
  %v28 = vld [vmem:[%s2 + $0xc] sm:$0xf]
  %v29 = vld [vmem:[%s2 + $0x10] sm:$0xf]
  %v30 = vld [vmem:[%s2 + $0x14] sm:$0xf]
  %v31 = vld [vmem:[%s2 + $0x18] sm:$0xf]
  %v32 = vld [vmem:[%s2 + $0x1c] sm:$0xf]
  %v33 = vld [vmem:[%s2 + $0x20] sm:$0xf]
  %v34 = vld [vmem:[%s2 + $0x24] sm:$0xf]
  %v35 = vld [vmem:[%s2 + $0x28] sm:$0xf]
  %v36 = vld [vmem:[%s2 + $0x2c] sm:$0xf]
  %v37 = vld [vmem:[%s2 + $0x30] sm:$0xf]
  %v38 = vld [vmem:[%s2 + $0x34] sm:$0xf]
  %v39 = vld [vmem:[%s2 + $0x38] sm:$0xf]
  %v40 = vld [vmem:[%s2 + $0x3c] sm:$0xf]
  %v41 = vld [vmem:[%s2 + $0x40] sm:$0xf]
  %v42 = vld [vmem:[%s2 + $0x44] sm:$0xf]
  %v43 = vld [vmem:[%s2 + $0x48] sm:$0xf]
  %v44 = vld [vmem:[%s2 + $0x4c] sm:$0xf]
  %v45 = vld [vmem:[%s2 + $0x50] sm:$0xf]
  %v46 = vld [vmem:[%s2 + $0x54] sm:$0xf]
  %v47 = vld [vmem:[%s2 + $0x58] sm:$0xf]
  %v48 = vld [vmem:[%s2 + $0x5c] sm:$0xf]
  %v49 = vld [vmem:[%s2 + $0x60] sm:$0xf]
  %v50 = vld [vmem:[%s2 + $0x64] sm:$0xf]
  %v51 = vld [vmem:[%s2 + $0x68] sm:$0xf]
  %v52 = vld [vmem:[%s2 + $0x6c] sm:$0xf]
  %v53 = vld [vmem:[%s2 + $0x70] sm:$0xf]
  %v54 = vld [vmem:[%s2 + $0x74] sm:$0xf]
  %v55 = vld [vmem:[%s2 + $0x78] sm:$0xf]
  %v56 = vld [vmem:[%s2 + $0x7c] sm:$0xf]
  %v57 = vld [vmem:[%s1] sm:$0xff]
  %v58 = vld [vmem:[%s1 + $0x8] sm:$0xff]
  %v91 = vunpack.c.l.b16 %v25
  %v92 = vunpack.c.l.b16 %v26
  %v93 = vunpack.c.l.b16 %v27
  %v94 = vunpack.c.l.b16 %v28
  %v95 = vunpack.c.l.b16 %v29
  %v96 = vunpack.c.l.b16 %v30
  %v97 = vunpack.c.l.b16 %v31
  %v98 = vunpack.c.l.b16 %v32
  %v99 = vunpack.c.l.b16 %v33
  %v100 = vunpack.c.l.b16 %v34
  %v101 = vunpack.c.l.b16 %v35
  %v102 = vunpack.c.l.b16 %v36
  %v103 = vunpack.c.l.b16 %v37
  %v104 = vunpack.c.l.b16 %v38
  %v105 = vunpack.c.l.b16 %v39
  %v106 = vunpack.c.l.b16 %v40
  %v107 = vunpack.c.l.b16 %v41
  %v108 = vunpack.c.l.b16 %v42
  %v109 = vunpack.c.l.b16 %v43
  %v110 = vunpack.c.l.b16 %v44
  %v111 = vunpack.c.l.b16 %v45
  %v112 = vunpack.c.l.b16 %v46
  %v113 = vunpack.c.l.b16 %v47
  %v114 = vunpack.c.l.b16 %v48
  %v115 = vunpack.c.l.b16 %v49
  %v116 = vunpack.c.l.b16 %v50
  %v117 = vunpack.c.l.b16 %v51
  %v118 = vunpack.c.l.b16 %v52
  %v119 = vunpack.c.l.b16 %v53
  %v120 = vunpack.c.l.b16 %v54
  %v121 = vunpack.c.l.b16 %v55
  %v122 = vunpack.c.l.b16 %v56
  %v123 = vpack.c.b16 %v92, %v91
  %v124 = vpack.c.b16 %v94, %v93
  %v125 = vpack.c.b16 %v96, %v95
  %v126 = vpack.c.b16 %v98, %v97
  %v127 = vpack.c.b16 %v100, %v99
  %v128 = vpack.c.b16 %v102, %v101
  %v129 = vpack.c.b16 %v104, %v103
  %v130 = vpack.c.b16 %v106, %v105
  %v131 = vpack.c.b16 %v108, %v107
  %v132 = vpack.c.b16 %v110, %v109
  %v133 = vpack.c.b16 %v112, %v111
  %v134 = vpack.c.b16 %v114, %v113
  %v135 = vpack.c.b16 %v116, %v115
  %v136 = vpack.c.b16 %v118, %v117
  %v137 = vpack.c.b16 %v120, %v119
  %v138 = vpack.c.b16 %v122, %v121
  %v141 = vunpack.c.l.b16 %v57
  %v142 = vunpack.c.h.b16 %v57
  %v143 = vunpack.c.l.b16 %v58
  %v144 = vunpack.c.h.b16 %v58
  %v145 = vpack.c.b16 %v143, %v141
  %v146 = vpack.c.b16 %v144, %v142
  %vm149 = vcmask 130048
  %v151 = vsel %vm149, %v123, 0
  %v154 = vsel %vm149, %v124, 0
  %v157 = vsel %vm149, %v125, 0
  %v160 = vsel %vm149, %v126, 0
  %v163 = vsel %vm149, %v127, 0
  %v166 = vsel %vm149, %v128, 0
  %v169 = vsel %vm149, %v129, 0
  %v172 = vsel %vm149, %v130, 0
  %v175 = vsel %vm149, %v131, 0
  %v178 = vsel %vm149, %v132, 0
  %v181 = vsel %vm149, %v133, 0
  %v184 = vsel %vm149, %v134, 0
  %v187 = vsel %vm149, %v135, 0
  %v190 = vsel %vm149, %v136, 0
  %v193 = vsel %vm149, %v137, 0
  %v196 = vsel %vm149, %v138, 0
  %198 = vmatprep.subr.bf16.mxu0 0
  %199 = vmatpush1.bf16.msra.mxu0 0
  %200 = vmatprep.subr.bf16.mxu0 0
  %201 = vmatpush1.bf16.msra.mxu0 0
  %202 = vmatprep.subr.bf16.mxu0 0
  %203 = vmatpush1.bf16.msra.mxu0 0
  %204 = vmatprep.subr.bf16.mxu0 0
  %205 = vmatpush1.bf16.msra.mxu0 0
  %206 = vmatprep.subr.bf16.mxu0 0
  %207 = vmatpush1.bf16.msra.mxu0 0
  %208 = vmatprep.subr.bf16.mxu0 0
  %209 = vmatpush1.bf16.msra.mxu0 0
  %210 = vmatprep.subr.bf16.mxu0 0
  %211 = vmatpush1.bf16.msra.mxu0 0
  %212 = vmatprep.subr.bf16.mxu0 %v146
  %213 = vmatpush1.bf16.msra.mxu0 %v145
  %214 = vmatprep.subr.bf16.mxu0 0
  %215 = vmatpush2.bf16.msra.mxu0 0
  %216 = vmatprep.subr.bf16.mxu0 0
  %217 = vmatpush2.bf16.msra.mxu0 0
  %218 = vmatprep.subr.bf16.mxu0 0
  %219 = vmatpush2.bf16.msra.mxu0 0
  %220 = vmatprep.subr.bf16.mxu0 0
  %221 = vmatpush2.bf16.msra.mxu0 0
  %222 = vmatprep.subr.bf16.mxu0 0
  %223 = vmatpush2.bf16.msra.mxu0 0
  %224 = vmatprep.subr.bf16.mxu0 0
  %225 = vmatpush2.bf16.msra.mxu0 0
  %226 = vmatprep.subr.bf16.mxu0 0
  %227 = vmatpush2.bf16.msra.mxu0 0
  %228 = vmatprep.subr.bf16.mxu0 0
  %229 = vmatpush2.bf16.msra.mxu0 0
  %230 = vmatprep.mubr.bf16.mxu0 0
  %231 = vmatmul.mubr.bf16.gmra.mxu0 %v151
  %v232 = vpop.f32.mrf.mxu0
  %v233 = vadd.f32 0.0, %v232
  %v234 = vpop.f32.mrf.mxu0
  %v235 = vadd.f32 0.0, %v234
  %v236 = vpop.f32.mrf.mxu0
  %v237 = vadd.f32 0.0, %v236
  %v238 = vpop.f32.mrf.mxu0
  %v239 = vadd.f32 0.0, %v238
  %240 = vmatprep.mubr.bf16.mxu0 0
  %241 = vmatmul.mubr.bf16.gmra.mxu0 %v154
  %v242 = vpop.f32.mrf.mxu0
  %v243 = vadd.f32 0.0, %v242
  %v244 = vpop.f32.mrf.mxu0
  %v245 = vadd.f32 0.0, %v244
  %v246 = vpop.f32.mrf.mxu0
  %v247 = vadd.f32 0.0, %v246
  %v248 = vpop.f32.mrf.mxu0
  %v249 = vadd.f32 0.0, %v248
  %250 = vmatprep.mubr.bf16.mxu0 0
  %251 = vmatmul.mubr.bf16.gmra.mxu0 %v157
  %v252 = vpop.f32.mrf.mxu0
  %v253 = vadd.f32 0.0, %v252
  %v254 = vpop.f32.mrf.mxu0
  %v255 = vadd.f32 0.0, %v254
  %v256 = vpop.f32.mrf.mxu0
  %v257 = vadd.f32 0.0, %v256
  %v258 = vpop.f32.mrf.mxu0
  %v259 = vadd.f32 0.0, %v258
  %260 = vmatprep.mubr.bf16.mxu0 0
  %261 = vmatmul.mubr.bf16.gmra.mxu0 %v160
  %v262 = vpop.f32.mrf.mxu0
  %v263 = vadd.f32 0.0, %v262
  %v264 = vpop.f32.mrf.mxu0
  %v265 = vadd.f32 0.0, %v264
  %v266 = vpop.f32.mrf.mxu0
  %v267 = vadd.f32 0.0, %v266
  %v268 = vpop.f32.mrf.mxu0
  %v269 = vadd.f32 0.0, %v268
  %270 = vmatprep.mubr.bf16.mxu0 0
  %271 = vmatmul.mubr.bf16.gmra.mxu0 %v163
  %v272 = vpop.f32.mrf.mxu0
  %v273 = vadd.f32 0.0, %v272
  %v274 = vpop.f32.mrf.mxu0
  %v275 = vadd.f32 0.0, %v274
  %v276 = vpop.f32.mrf.mxu0
  %v277 = vadd.f32 0.0, %v276
  %v278 = vpop.f32.mrf.mxu0
  %v279 = vadd.f32 0.0, %v278
  %280 = vmatprep.mubr.bf16.mxu0 0
  %281 = vmatmul.mubr.bf16.gmra.mxu0 %v166
  %v282 = vpop.f32.mrf.mxu0
  %v283 = vadd.f32 0.0, %v282
  %v284 = vpop.f32.mrf.mxu0
  %v285 = vadd.f32 0.0, %v284
  %v286 = vpop.f32.mrf.mxu0
  %v287 = vadd.f32 0.0, %v286
  %v288 = vpop.f32.mrf.mxu0
  %v289 = vadd.f32 0.0, %v288
  %290 = vmatprep.mubr.bf16.mxu0 0
  %291 = vmatmul.mubr.bf16.gmra.mxu0 %v169
  %v292 = vpop.f32.mrf.mxu0
  %v293 = vadd.f32 0.0, %v292
  %v294 = vpop.f32.mrf.mxu0
  %v295 = vadd.f32 0.0, %v294
  %v296 = vpop.f32.mrf.mxu0
  %v297 = vadd.f32 0.0, %v296
  %v298 = vpop.f32.mrf.mxu0
  %v299 = vadd.f32 0.0, %v298
  %300 = vmatprep.mubr.bf16.mxu0 0
  %301 = vmatmul.mubr.bf16.gmra.mxu0 %v172
  %v302 = vpop.f32.mrf.mxu0
  %v303 = vadd.f32 0.0, %v302
  %v304 = vpop.f32.mrf.mxu0
  %v305 = vadd.f32 0.0, %v304
  %v306 = vpop.f32.mrf.mxu0
  %v307 = vadd.f32 0.0, %v306
  %v308 = vpop.f32.mrf.mxu0
  %v309 = vadd.f32 0.0, %v308
  %310 = vmatprep.mubr.bf16.mxu0 0
  %311 = vmatmul.mubr.bf16.gmra.mxu0 %v175
  %v312 = vpop.f32.mrf.mxu0
  %v313 = vadd.f32 0.0, %v312
  %v314 = vpop.f32.mrf.mxu0
  %v315 = vadd.f32 0.0, %v314
  %v316 = vpop.f32.mrf.mxu0
  %v317 = vadd.f32 0.0, %v316
  %v318 = vpop.f32.mrf.mxu0
  %v319 = vadd.f32 0.0, %v318
  %320 = vmatprep.mubr.bf16.mxu0 0
  %321 = vmatmul.mubr.bf16.gmra.mxu0 %v178
  %v322 = vpop.f32.mrf.mxu0
  %v323 = vadd.f32 0.0, %v322
  %v324 = vpop.f32.mrf.mxu0
  %v325 = vadd.f32 0.0, %v324
  %v326 = vpop.f32.mrf.mxu0
  %v327 = vadd.f32 0.0, %v326
  %v328 = vpop.f32.mrf.mxu0
  %v329 = vadd.f32 0.0, %v328
  %330 = vmatprep.mubr.bf16.mxu0 0
  %331 = vmatmul.mubr.bf16.gmra.mxu0 %v181
  %v332 = vpop.f32.mrf.mxu0
  %v333 = vadd.f32 0.0, %v332
  %v334 = vpop.f32.mrf.mxu0
  %v335 = vadd.f32 0.0, %v334
  %v336 = vpop.f32.mrf.mxu0
  %v337 = vadd.f32 0.0, %v336
  %v338 = vpop.f32.mrf.mxu0
  %v339 = vadd.f32 0.0, %v338
  %340 = vmatprep.mubr.bf16.mxu0 0
  %341 = vmatmul.mubr.bf16.gmra.mxu0 %v184
  %v342 = vpop.f32.mrf.mxu0
  %v343 = vadd.f32 0.0, %v342
  %v344 = vpop.f32.mrf.mxu0
  %v345 = vadd.f32 0.0, %v344
  %v346 = vpop.f32.mrf.mxu0
  %v347 = vadd.f32 0.0, %v346
  %v348 = vpop.f32.mrf.mxu0
  %v349 = vadd.f32 0.0, %v348
  %350 = vmatprep.mubr.bf16.mxu0 0
  %351 = vmatmul.mubr.bf16.gmra.mxu0 %v187
  %v352 = vpop.f32.mrf.mxu0
  %v353 = vadd.f32 0.0, %v352
  %v354 = vpop.f32.mrf.mxu0
  %v355 = vadd.f32 0.0, %v354
  %v356 = vpop.f32.mrf.mxu0
  %v357 = vadd.f32 0.0, %v356
  %v358 = vpop.f32.mrf.mxu0
  %v359 = vadd.f32 0.0, %v358
  %360 = vmatprep.mubr.bf16.mxu0 0
  %361 = vmatmul.mubr.bf16.gmra.mxu0 %v190
  %v362 = vpop.f32.mrf.mxu0
  %v363 = vadd.f32 0.0, %v362
  %v364 = vpop.f32.mrf.mxu0
  %v365 = vadd.f32 0.0, %v364
  %v366 = vpop.f32.mrf.mxu0
  %v367 = vadd.f32 0.0, %v366
  %v368 = vpop.f32.mrf.mxu0
  %v369 = vadd.f32 0.0, %v368
  %370 = vmatprep.mubr.bf16.mxu0 0
  %371 = vmatmul.mubr.bf16.gmra.mxu0 %v193
  %v372 = vpop.f32.mrf.mxu0
  %v373 = vadd.f32 0.0, %v372
  %v374 = vpop.f32.mrf.mxu0
  %v375 = vadd.f32 0.0, %v374
  %v376 = vpop.f32.mrf.mxu0
  %v377 = vadd.f32 0.0, %v376
  %v378 = vpop.f32.mrf.mxu0
  %v379 = vadd.f32 0.0, %v378
  %380 = vmatprep.mubr.bf16.mxu0 0
  %381 = vmatmul.mubr.bf16.gmra.mxu0 %v196
  %v382 = vpop.f32.mrf.mxu0
  %v383 = vadd.f32 0.0, %v382
  %v384 = vpop.f32.mrf.mxu0
  %v385 = vadd.f32 0.0, %v384
  %v386 = vpop.f32.mrf.mxu0
  %v387 = vadd.f32 0.0, %v386
  %v388 = vpop.f32.mrf.mxu0
  %v389 = vadd.f32 0.0, %v388
  %390 = vdwg.mxu0
  %v391 = vpack.c.bf16 %v237, %v233
  %v392 = vpack.c.bf16 %v239, %v235
  %v393 = vpack.c.bf16 %v247, %v243
  %v394 = vpack.c.bf16 %v249, %v245
  %v395 = vpack.c.bf16 %v257, %v253
  %v396 = vpack.c.bf16 %v259, %v255
  %v397 = vpack.c.bf16 %v267, %v263
  %v398 = vpack.c.bf16 %v269, %v265
  %v399 = vpack.c.bf16 %v277, %v273
  %v400 = vpack.c.bf16 %v279, %v275
  %v401 = vpack.c.bf16 %v287, %v283
  %v402 = vpack.c.bf16 %v289, %v285
  %v403 = vpack.c.bf16 %v297, %v293
  %v404 = vpack.c.bf16 %v299, %v295
  %v405 = vpack.c.bf16 %v307, %v303
  %v406 = vpack.c.bf16 %v309, %v305
  %v407 = vpack.c.bf16 %v317, %v313
  %v408 = vpack.c.bf16 %v319, %v315
  %v409 = vpack.c.bf16 %v327, %v323
  %v410 = vpack.c.bf16 %v329, %v325
  %v411 = vpack.c.bf16 %v337, %v333
  %v412 = vpack.c.bf16 %v339, %v335
  %v413 = vpack.c.bf16 %v347, %v343
  %v414 = vpack.c.bf16 %v349, %v345
  %v415 = vpack.c.bf16 %v357, %v353
  %v416 = vpack.c.bf16 %v359, %v355
  %v417 = vpack.c.bf16 %v367, %v363
  %v418 = vpack.c.bf16 %v369, %v365
  %v419 = vpack.c.bf16 %v377, %v373
  %v420 = vpack.c.bf16 %v379, %v375
  %v421 = vpack.c.bf16 %v387, %v383
  %v422 = vpack.c.bf16 %v389, %v385
  %v423 = vmax.bf16 %v391, 0
  %v424 = vmax.bf16 %v392, 0
  %v425 = vmax.bf16 %v393, 0
  %v426 = vmax.bf16 %v394, 0
  %v427 = vmax.bf16 %v395, 0
  %v428 = vmax.bf16 %v396, 0
  %v429 = vmax.bf16 %v397, 0
  %v430 = vmax.bf16 %v398, 0
  %v431 = vmax.bf16 %v399, 0
  %v432 = vmax.bf16 %v400, 0
  %v433 = vmax.bf16 %v401, 0
  %v434 = vmax.bf16 %v402, 0
  %v435 = vmax.bf16 %v403, 0
  %v436 = vmax.bf16 %v404, 0
  %v437 = vmax.bf16 %v405, 0
  %v438 = vmax.bf16 %v406, 0
  %v439 = vmax.bf16 %v407, 0
  %v440 = vmax.bf16 %v408, 0
  %v441 = vmax.bf16 %v409, 0
  %v442 = vmax.bf16 %v410, 0
  %v443 = vmax.bf16 %v411, 0
  %v444 = vmax.bf16 %v412, 0
  %v445 = vmax.bf16 %v413, 0
  %v446 = vmax.bf16 %v414, 0
  %v447 = vmax.bf16 %v415, 0
  %v448 = vmax.bf16 %v416, 0
  %v449 = vmax.bf16 %v417, 0
  %v450 = vmax.bf16 %v418, 0
  %v451 = vmax.bf16 %v419, 0
  %v452 = vmax.bf16 %v420, 0
  %v453 = vmax.bf16 %v421, 0
  %v454 = vmax.bf16 %v422, 0
  %v455 = vld [vmem:[%s3] sm:$0xff]
  %v456 = vld [vmem:[%s3 + $0x8] sm:$0xff]
  %v457 = vld [vmem:[%s3 + $0x10] sm:$0xff]
  %v458 = vld [vmem:[%s3 + $0x18] sm:$0xff]
  %v459 = vld [vmem:[%s3 + $0x20] sm:$0xff]
  %v460 = vld [vmem:[%s3 + $0x28] sm:$0xff]
  %v461 = vld [vmem:[%s3 + $0x30] sm:$0xff]
  %v462 = vld [vmem:[%s3 + $0x38] sm:$0xff]
  %v463 = vld [vmem:[%s3 + $0x40] sm:$0xff]
  %v464 = vld [vmem:[%s3 + $0x48] sm:$0xff]
  %v465 = vld [vmem:[%s3 + $0x50] sm:$0xff]
  %v466 = vld [vmem:[%s3 + $0x58] sm:$0xff]
  %v467 = vld [vmem:[%s3 + $0x60] sm:$0xff]
  %v468 = vld [vmem:[%s3 + $0x68] sm:$0xff]
  %v469 = vld [vmem:[%s3 + $0x70] sm:$0xff]
  %v470 = vld [vmem:[%s3 + $0x78] sm:$0xff]
  %v471 = vld [vmem:[%s3 + $0x80] sm:$0xff]
  %v472 = vld [vmem:[%s3 + $0x88] sm:$0xff]
  %v473 = vld [vmem:[%s3 + $0x90] sm:$0xff]
  %v474 = vld [vmem:[%s3 + $0x98] sm:$0xff]
  %v475 = vld [vmem:[%s3 + $0xa0] sm:$0xff]
  %v476 = vld [vmem:[%s3 + $0xa8] sm:$0xff]
  %v477 = vld [vmem:[%s3 + $0xb0] sm:$0xff]
  %v478 = vld [vmem:[%s3 + $0xb8] sm:$0xff]
  %v479 = vld [vmem:[%s3 + $0xc0] sm:$0xff]
  %v480 = vld [vmem:[%s3 + $0xc8] sm:$0xff]
  %v481 = vld [vmem:[%s3 + $0xd0] sm:$0xff]
  %v482 = vld [vmem:[%s3 + $0xd8] sm:$0xff]
  %v483 = vld [vmem:[%s3 + $0xe0] sm:$0xff]
  %v484 = vld [vmem:[%s3 + $0xe8] sm:$0xff]
  %v485 = vld [vmem:[%s3 + $0xf0] sm:$0xff]
  %v486 = vld [vmem:[%s3 + $0xf8] sm:$0xff]
  %v519 = vunpack.c.l.b16 %v455
  %v520 = vunpack.c.h.b16 %v455
  %v521 = vunpack.c.l.b16 %v456
  %v522 = vunpack.c.h.b16 %v456
  %v523 = vunpack.c.l.b16 %v457
  %v524 = vunpack.c.h.b16 %v457
  %v525 = vunpack.c.l.b16 %v458
  %v526 = vunpack.c.h.b16 %v458
  %v527 = vunpack.c.l.b16 %v459
  %v528 = vunpack.c.h.b16 %v459
  %v529 = vunpack.c.l.b16 %v460
  %v530 = vunpack.c.h.b16 %v460
  %v531 = vunpack.c.l.b16 %v461
  %v532 = vunpack.c.h.b16 %v461
  %v533 = vunpack.c.l.b16 %v462
  %v534 = vunpack.c.h.b16 %v462
  %v535 = vunpack.c.l.b16 %v463
  %v536 = vunpack.c.h.b16 %v463
  %v537 = vunpack.c.l.b16 %v464
  %v538 = vunpack.c.h.b16 %v464
  %v539 = vunpack.c.l.b16 %v465
  %v540 = vunpack.c.h.b16 %v465
  %v541 = vunpack.c.l.b16 %v466
  %v542 = vunpack.c.h.b16 %v466
  %v543 = vunpack.c.l.b16 %v467
  %v544 = vunpack.c.h.b16 %v467
  %v545 = vunpack.c.l.b16 %v468
  %v546 = vunpack.c.h.b16 %v468
  %v547 = vunpack.c.l.b16 %v469
  %v548 = vunpack.c.h.b16 %v469
  %v549 = vunpack.c.l.b16 %v470
  %v550 = vunpack.c.h.b16 %v470
  %v551 = vunpack.c.l.b16 %v471
  %v552 = vunpack.c.h.b16 %v471
  %v553 = vunpack.c.l.b16 %v472
  %v554 = vunpack.c.h.b16 %v472
  %v555 = vunpack.c.l.b16 %v473
  %v556 = vunpack.c.h.b16 %v473
  %v557 = vunpack.c.l.b16 %v474
  %v558 = vunpack.c.h.b16 %v474
  %v559 = vunpack.c.l.b16 %v475
  %v560 = vunpack.c.h.b16 %v475
  %v561 = vunpack.c.l.b16 %v476
  %v562 = vunpack.c.h.b16 %v476
  %v563 = vunpack.c.l.b16 %v477
  %v564 = vunpack.c.h.b16 %v477
  %v565 = vunpack.c.l.b16 %v478
  %v566 = vunpack.c.h.b16 %v478
  %v567 = vunpack.c.l.b16 %v479
  %v568 = vunpack.c.h.b16 %v479
  %v569 = vunpack.c.l.b16 %v480
  %v570 = vunpack.c.h.b16 %v480
  %v571 = vunpack.c.l.b16 %v481
  %v572 = vunpack.c.h.b16 %v481
  %v573 = vunpack.c.l.b16 %v482
  %v574 = vunpack.c.h.b16 %v482
  %v575 = vunpack.c.l.b16 %v483
  %v576 = vunpack.c.h.b16 %v483
  %v577 = vunpack.c.l.b16 %v484
  %v578 = vunpack.c.h.b16 %v484
  %v579 = vunpack.c.l.b16 %v485
  %v580 = vunpack.c.h.b16 %v485
  %v581 = vunpack.c.l.b16 %v486
  %v582 = vunpack.c.h.b16 %v486
  %v583 = vpack.c.b16 %v521, %v519
  %v584 = vpack.c.b16 %v522, %v520
  %v585 = vpack.c.b16 %v525, %v523
  %v586 = vpack.c.b16 %v526, %v524
  %v587 = vpack.c.b16 %v529, %v527
  %v588 = vpack.c.b16 %v530, %v528
  %v589 = vpack.c.b16 %v533, %v531
  %v590 = vpack.c.b16 %v534, %v532
  %v591 = vpack.c.b16 %v537, %v535
  %v592 = vpack.c.b16 %v538, %v536
  %v593 = vpack.c.b16 %v541, %v539
  %v594 = vpack.c.b16 %v542, %v540
  %v595 = vpack.c.b16 %v545, %v543
  %v596 = vpack.c.b16 %v546, %v544
  %v597 = vpack.c.b16 %v549, %v547
  %v598 = vpack.c.b16 %v550, %v548
  %v599 = vpack.c.b16 %v553, %v551
  %v600 = vpack.c.b16 %v554, %v552
  %v601 = vpack.c.b16 %v557, %v555
  %v602 = vpack.c.b16 %v558, %v556
  %v603 = vpack.c.b16 %v561, %v559
  %v604 = vpack.c.b16 %v562, %v560
  %v605 = vpack.c.b16 %v565, %v563
  %v606 = vpack.c.b16 %v566, %v564
  %v607 = vpack.c.b16 %v569, %v567
  %v608 = vpack.c.b16 %v570, %v568
  %v609 = vpack.c.b16 %v573, %v571
  %v610 = vpack.c.b16 %v574, %v572
  %v611 = vpack.c.b16 %v577, %v575
  %v612 = vpack.c.b16 %v578, %v576
  %v613 = vpack.c.b16 %v581, %v579
  %v614 = vpack.c.b16 %v582, %v580
  %647 = vmatprep.subr.bf16.mxu0 %v438
  %648 = vmatpush1.bf16.msra.mxu0 %v437
  %649 = vmatprep.subr.bf16.mxu0 %v436
  %650 = vmatpush1.bf16.msra.mxu0 %v435
  %651 = vmatprep.subr.bf16.mxu0 %v434
  %652 = vmatpush1.bf16.msra.mxu0 %v433
  %653 = vmatprep.subr.bf16.mxu0 %v432
  %654 = vmatpush1.bf16.msra.mxu0 %v431
  %655 = vmatprep.subr.bf16.mxu0 %v430
  %656 = vmatpush1.bf16.msra.mxu0 %v429
  %657 = vmatprep.subr.bf16.mxu0 %v428
  %658 = vmatpush1.bf16.msra.mxu0 %v427
  %659 = vmatprep.subr.bf16.mxu0 %v426
  %660 = vmatpush1.bf16.msra.mxu0 %v425
  %661 = vmatprep.subr.bf16.mxu0 %v424
  %662 = vmatpush1.bf16.msra.mxu0 %v423
  %663 = vmatprep.subr.bf16.mxu0 %v454
  %664 = vmatpush2.bf16.msra.mxu0 %v453
  %665 = vmatprep.subr.bf16.mxu0 %v452
  %666 = vmatpush2.bf16.msra.mxu0 %v451
  %667 = vmatprep.subr.bf16.mxu0 %v450
  %668 = vmatpush2.bf16.msra.mxu0 %v449
  %669 = vmatprep.subr.bf16.mxu0 %v448
  %670 = vmatpush2.bf16.msra.mxu0 %v447
  %671 = vmatprep.subr.bf16.mxu0 %v446
  %672 = vmatpush2.bf16.msra.mxu0 %v445
  %673 = vmatprep.subr.bf16.mxu0 %v444
  %674 = vmatpush2.bf16.msra.mxu0 %v443
  %675 = vmatprep.subr.bf16.mxu0 %v442
  %676 = vmatpush2.bf16.msra.mxu0 %v441
  %677 = vmatprep.subr.bf16.mxu0 %v440
  %678 = vmatpush2.bf16.msra.mxu0 %v439
  %679 = vmatprep.mubr.bf16.mxu0 %v584
  %680 = vmatmul.mubr.bf16.gmra.mxu0 %v583
  %v681 = vpop.f32.mrf.mxu0
  %v682 = vadd.f32 0.0, %v681
  %v683 = vpop.f32.mrf.mxu0
  %v684 = vadd.f32 0.0, %v683
  %v685 = vpop.f32.mrf.mxu0
  %v686 = vadd.f32 0.0, %v685
  %v687 = vpop.f32.mrf.mxu0
  %v688 = vadd.f32 0.0, %v687
  %689 = vmatprep.mubr.bf16.mxu0 %v586
  %690 = vmatmul.mubr.bf16.gmra.mxu0 %v585
  %v691 = vpop.f32.mrf.mxu0
  %v692 = vadd.f32 0.0, %v691
  %v693 = vpop.f32.mrf.mxu0
  %v694 = vadd.f32 0.0, %v693
  %v695 = vpop.f32.mrf.mxu0
  %v696 = vadd.f32 0.0, %v695
  %v697 = vpop.f32.mrf.mxu0
  %v698 = vadd.f32 0.0, %v697
  %699 = vmatprep.mubr.bf16.mxu0 %v588
  %700 = vmatmul.mubr.bf16.gmra.mxu0 %v587
  %v701 = vpop.f32.mrf.mxu0
  %v702 = vadd.f32 0.0, %v701
  %v703 = vpop.f32.mrf.mxu0
  %v704 = vadd.f32 0.0, %v703
  %v705 = vpop.f32.mrf.mxu0
  %v706 = vadd.f32 0.0, %v705
  %v707 = vpop.f32.mrf.mxu0
  %v708 = vadd.f32 0.0, %v707
  %709 = vmatprep.mubr.bf16.mxu0 %v590
  %710 = vmatmul.mubr.bf16.gmra.mxu0 %v589
  %v711 = vpop.f32.mrf.mxu0
  %v712 = vadd.f32 0.0, %v711
  %v713 = vpop.f32.mrf.mxu0
  %v714 = vadd.f32 0.0, %v713
  %v715 = vpop.f32.mrf.mxu0
  %v716 = vadd.f32 0.0, %v715
  %v717 = vpop.f32.mrf.mxu0
  %v718 = vadd.f32 0.0, %v717
  %719 = vmatprep.mubr.bf16.mxu0 %v592
  %720 = vmatmul.mubr.bf16.gmra.mxu0 %v591
  %v721 = vpop.f32.mrf.mxu0
  %v722 = vadd.f32 0.0, %v721
  %v723 = vpop.f32.mrf.mxu0
  %v724 = vadd.f32 0.0, %v723
  %v725 = vpop.f32.mrf.mxu0
  %v726 = vadd.f32 0.0, %v725
  %v727 = vpop.f32.mrf.mxu0
  %v728 = vadd.f32 0.0, %v727
  %729 = vmatprep.mubr.bf16.mxu0 %v594
  %730 = vmatmul.mubr.bf16.gmra.mxu0 %v593
  %v731 = vpop.f32.mrf.mxu0
  %v732 = vadd.f32 0.0, %v731
  %v733 = vpop.f32.mrf.mxu0
  %v734 = vadd.f32 0.0, %v733
  %v735 = vpop.f32.mrf.mxu0
  %v736 = vadd.f32 0.0, %v735
  %v737 = vpop.f32.mrf.mxu0
  %v738 = vadd.f32 0.0, %v737
  %739 = vmatprep.mubr.bf16.mxu0 %v596
  %740 = vmatmul.mubr.bf16.gmra.mxu0 %v595
  %v741 = vpop.f32.mrf.mxu0
  %v742 = vadd.f32 0.0, %v741
  %v743 = vpop.f32.mrf.mxu0
  %v744 = vadd.f32 0.0, %v743
  %v745 = vpop.f32.mrf.mxu0
  %v746 = vadd.f32 0.0, %v745
  %v747 = vpop.f32.mrf.mxu0
  %v748 = vadd.f32 0.0, %v747
  %749 = vmatprep.mubr.bf16.mxu0 %v598
  %750 = vmatmul.mubr.bf16.gmra.mxu0 %v597
  %v751 = vpop.f32.mrf.mxu0
  %v752 = vadd.f32 0.0, %v751
  %v753 = vpop.f32.mrf.mxu0
  %v754 = vadd.f32 0.0, %v753
  %v755 = vpop.f32.mrf.mxu0
  %v756 = vadd.f32 0.0, %v755
  %v757 = vpop.f32.mrf.mxu0
  %v758 = vadd.f32 0.0, %v757
  %759 = vmatprep.mubr.bf16.mxu0 %v600
  %760 = vmatmul.mubr.bf16.gmra.mxu0 %v599
  %v761 = vpop.f32.mrf.mxu0
  %v762 = vadd.f32 0.0, %v761
  %v763 = vpop.f32.mrf.mxu0
  %v764 = vadd.f32 0.0, %v763
  %v765 = vpop.f32.mrf.mxu0
  %v766 = vadd.f32 0.0, %v765
  %v767 = vpop.f32.mrf.mxu0
  %v768 = vadd.f32 0.0, %v767
  %769 = vmatprep.mubr.bf16.mxu0 %v602
  %770 = vmatmul.mubr.bf16.gmra.mxu0 %v601
  %v771 = vpop.f32.mrf.mxu0
  %v772 = vadd.f32 0.0, %v771
  %v773 = vpop.f32.mrf.mxu0
  %v774 = vadd.f32 0.0, %v773
  %v775 = vpop.f32.mrf.mxu0
  %v776 = vadd.f32 0.0, %v775
  %v777 = vpop.f32.mrf.mxu0
  %v778 = vadd.f32 0.0, %v777
  %779 = vmatprep.mubr.bf16.mxu0 %v604
  %780 = vmatmul.mubr.bf16.gmra.mxu0 %v603
  %v781 = vpop.f32.mrf.mxu0
  %v782 = vadd.f32 0.0, %v781
  %v783 = vpop.f32.mrf.mxu0
  %v784 = vadd.f32 0.0, %v783
  %v785 = vpop.f32.mrf.mxu0
  %v786 = vadd.f32 0.0, %v785
  %v787 = vpop.f32.mrf.mxu0
  %v788 = vadd.f32 0.0, %v787
  %789 = vmatprep.mubr.bf16.mxu0 %v606
  %790 = vmatmul.mubr.bf16.gmra.mxu0 %v605
  %v791 = vpop.f32.mrf.mxu0
  %v792 = vadd.f32 0.0, %v791
  %v793 = vpop.f32.mrf.mxu0
  %v794 = vadd.f32 0.0, %v793
  %v795 = vpop.f32.mrf.mxu0
  %v796 = vadd.f32 0.0, %v795
  %v797 = vpop.f32.mrf.mxu0
  %v798 = vadd.f32 0.0, %v797
  %799 = vmatprep.mubr.bf16.mxu0 %v608
  %800 = vmatmul.mubr.bf16.gmra.mxu0 %v607
  %v801 = vpop.f32.mrf.mxu0
  %v802 = vadd.f32 0.0, %v801
  %v803 = vpop.f32.mrf.mxu0
  %v804 = vadd.f32 0.0, %v803
  %v805 = vpop.f32.mrf.mxu0
  %v806 = vadd.f32 0.0, %v805
  %v807 = vpop.f32.mrf.mxu0
  %v808 = vadd.f32 0.0, %v807
  %809 = vmatprep.mubr.bf16.mxu0 %v610
  %810 = vmatmul.mubr.bf16.gmra.mxu0 %v609
  %v811 = vpop.f32.mrf.mxu0
  %v812 = vadd.f32 0.0, %v811
  %v813 = vpop.f32.mrf.mxu0
  %v814 = vadd.f32 0.0, %v813
  %v815 = vpop.f32.mrf.mxu0
  %v816 = vadd.f32 0.0, %v815
  %v817 = vpop.f32.mrf.mxu0
  %v818 = vadd.f32 0.0, %v817
  %819 = vmatprep.mubr.bf16.mxu0 %v612
  %820 = vmatmul.mubr.bf16.gmra.mxu0 %v611
  %v821 = vpop.f32.mrf.mxu0
  %v822 = vadd.f32 0.0, %v821
  %v823 = vpop.f32.mrf.mxu0
  %v824 = vadd.f32 0.0, %v823
  %v825 = vpop.f32.mrf.mxu0
  %v826 = vadd.f32 0.0, %v825
  %v827 = vpop.f32.mrf.mxu0
  %v828 = vadd.f32 0.0, %v827
  %829 = vmatprep.mubr.bf16.mxu0 %v614
  %830 = vmatmul.mubr.bf16.gmra.mxu0 %v613
  %v831 = vpop.f32.mrf.mxu0
  %v832 = vadd.f32 0.0, %v831
  %v833 = vpop.f32.mrf.mxu0
  %v834 = vadd.f32 0.0, %v833
  %v835 = vpop.f32.mrf.mxu0
  %v836 = vadd.f32 0.0, %v835
  %v837 = vpop.f32.mrf.mxu0
  %v838 = vadd.f32 0.0, %v837
  %839 = vdwg.mxu0
  %v840 = vpack.c.bf16 %v686, %v682
  %v841 = vpack.c.bf16 %v688, %v684
  %v842 = vpack.c.bf16 %v696, %v692
  %v843 = vpack.c.bf16 %v698, %v694
  %v844 = vpack.c.bf16 %v706, %v702
  %v845 = vpack.c.bf16 %v708, %v704
  %v846 = vpack.c.bf16 %v716, %v712
  %v847 = vpack.c.bf16 %v718, %v714
  %v848 = vpack.c.bf16 %v726, %v722
  %v849 = vpack.c.bf16 %v728, %v724
  %v850 = vpack.c.bf16 %v736, %v732
  %v851 = vpack.c.bf16 %v738, %v734
  %v852 = vpack.c.bf16 %v746, %v742
  %v853 = vpack.c.bf16 %v748, %v744
  %v854 = vpack.c.bf16 %v756, %v752
  %v855 = vpack.c.bf16 %v758, %v754
  %v856 = vpack.c.bf16 %v766, %v762
  %v857 = vpack.c.bf16 %v768, %v764
  %v858 = vpack.c.bf16 %v776, %v772
  %v859 = vpack.c.bf16 %v778, %v774
  %v860 = vpack.c.bf16 %v786, %v782
  %v861 = vpack.c.bf16 %v788, %v784
  %v862 = vpack.c.bf16 %v796, %v792
  %v863 = vpack.c.bf16 %v798, %v794
  %v864 = vpack.c.bf16 %v806, %v802
  %v865 = vpack.c.bf16 %v808, %v804
  %v866 = vpack.c.bf16 %v816, %v812
  %v867 = vpack.c.bf16 %v818, %v814
  %v868 = vpack.c.bf16 %v826, %v822
  %v869 = vpack.c.bf16 %v828, %v824
  %v870 = vpack.c.bf16 %v836, %v832
  %v871 = vpack.c.bf16 %v838, %v834
  %v872 = vld [vmem:[%s4] sm:$0xf]
  %v873 = vld [vmem:[%s4 + $0x4] sm:$0xf]
  %v874 = vld [vmem:[%s4 + $0x8] sm:$0xf]
  %v875 = vld [vmem:[%s4 + $0xc] sm:$0xf]
  %v876 = vld [vmem:[%s4 + $0x10] sm:$0xf]
  %v877 = vld [vmem:[%s4 + $0x14] sm:$0xf]
  %v878 = vld [vmem:[%s4 + $0x18] sm:$0xf]
  %v879 = vld [vmem:[%s4 + $0x1c] sm:$0xf]
  %v880 = vld [vmem:[%s4 + $0x20] sm:$0xf]
  %v881 = vld [vmem:[%s4 + $0x24] sm:$0xf]
  %v882 = vld [vmem:[%s4 + $0x28] sm:$0xf]
  %v883 = vld [vmem:[%s4 + $0x2c] sm:$0xf]
  %v884 = vld [vmem:[%s4 + $0x30] sm:$0xf]
  %v885 = vld [vmem:[%s4 + $0x34] sm:$0xf]
  %v886 = vld [vmem:[%s4 + $0x38] sm:$0xf]
  %v887 = vld [vmem:[%s4 + $0x3c] sm:$0xf]
  %v888 = vld [vmem:[%s4 + $0x40] sm:$0xf]
  %v889 = vld [vmem:[%s4 + $0x44] sm:$0xf]
  %v890 = vld [vmem:[%s4 + $0x48] sm:$0xf]
  %v891 = vld [vmem:[%s4 + $0x4c] sm:$0xf]
  %v892 = vld [vmem:[%s4 + $0x50] sm:$0xf]
  %v893 = vld [vmem:[%s4 + $0x54] sm:$0xf]
  %v894 = vld [vmem:[%s4 + $0x58] sm:$0xf]
  %v895 = vld [vmem:[%s4 + $0x5c] sm:$0xf]
  %v896 = vld [vmem:[%s4 + $0x60] sm:$0xf]
  %v897 = vld [vmem:[%s4 + $0x64] sm:$0xf]
  %v898 = vld [vmem:[%s4 + $0x68] sm:$0xf]
  %v899 = vld [vmem:[%s4 + $0x6c] sm:$0xf]
  %v900 = vld [vmem:[%s4 + $0x70] sm:$0xf]
  %v901 = vld [vmem:[%s4 + $0x74] sm:$0xf]
  %v902 = vld [vmem:[%s4 + $0x78] sm:$0xf]
  %v903 = vld [vmem:[%s4 + $0x7c] sm:$0xf]
  %905 = vset.pattern.permute.xlu0 0
  %906 = vperm.xlu0 %905, %v872
  %v907 = vpop.permute.xlu0 %906
  %v910 = vunpack.c.l.s4 839922192
  %v911 = vunpack.c.0.s8 %v910
  %v912 = vlaneseq
  %v913 = vshrl.u32 %v912, 7
  %v914 = vsub.s32 %v911, %v913
  %v915 = vrot.slane %v907, %v914
  %917 = vset.pattern.permute.xlu0 0
  %918 = vperm.xlu0 %917, %v873
  %v919 = vpop.permute.xlu0 %918
  %v922 = vunpack.c.l.s4 839922192
  %v923 = vunpack.c.0.s8 %v922
  %v924 = vlaneseq
  %v925 = vshrl.u32 %v924, 7
  %v926 = vsub.s32 %v923, %v925
  %v927 = vrot.slane %v919, %v926
  %929 = vset.pattern.permute.xlu0 0
  %930 = vperm.xlu0 %929, %v874
  %v931 = vpop.permute.xlu0 %930
  %v934 = vunpack.c.l.s4 839922192
  %v935 = vunpack.c.0.s8 %v934
  %v936 = vlaneseq
  %v937 = vshrl.u32 %v936, 7
  %v938 = vsub.s32 %v935, %v937
  %v939 = vrot.slane %v931, %v938
  %941 = vset.pattern.permute.xlu0 0
  %942 = vperm.xlu0 %941, %v875
  %v943 = vpop.permute.xlu0 %942
  %v946 = vunpack.c.l.s4 839922192
  %v947 = vunpack.c.0.s8 %v946
  %v948 = vlaneseq
  %v949 = vshrl.u32 %v948, 7
  %v950 = vsub.s32 %v947, %v949
  %v951 = vrot.slane %v943, %v950
  %953 = vset.pattern.permute.xlu0 0
  %954 = vperm.xlu0 %953, %v876
  %v955 = vpop.permute.xlu0 %954
  %v958 = vunpack.c.l.s4 839922192
  %v959 = vunpack.c.0.s8 %v958
  %v960 = vlaneseq
  %v961 = vshrl.u32 %v960, 7
  %v962 = vsub.s32 %v959, %v961
  %v963 = vrot.slane %v955, %v962
  %965 = vset.pattern.permute.xlu0 0
  %966 = vperm.xlu0 %965, %v877
  %v967 = vpop.permute.xlu0 %966
  %v970 = vunpack.c.l.s4 839922192
  %v971 = vunpack.c.0.s8 %v970
  %v972 = vlaneseq
  %v973 = vshrl.u32 %v972, 7
  %v974 = vsub.s32 %v971, %v973
  %v975 = vrot.slane %v967, %v974
  %977 = vset.pattern.permute.xlu0 0
  %978 = vperm.xlu0 %977, %v878
  %v979 = vpop.permute.xlu0 %978
  %v982 = vunpack.c.l.s4 839922192
  %v983 = vunpack.c.0.s8 %v982
  %v984 = vlaneseq
  %v985 = vshrl.u32 %v984, 7
  %v986 = vsub.s32 %v983, %v985
  %v987 = vrot.slane %v979, %v986
  %989 = vset.pattern.permute.xlu0 0
  %990 = vperm.xlu0 %989, %v879
  %v991 = vpop.permute.xlu0 %990
  %v994 = vunpack.c.l.s4 839922192
  %v995 = vunpack.c.0.s8 %v994
  %v996 = vlaneseq
  %v997 = vshrl.u32 %v996, 7
  %v998 = vsub.s32 %v995, %v997
  %v999 = vrot.slane %v991, %v998
  %1001 = vset.pattern.permute.xlu0 0
  %1002 = vperm.xlu0 %1001, %v880
  %v1003 = vpop.permute.xlu0 %1002
  %v1006 = vunpack.c.l.s4 839922192
  %v1007 = vunpack.c.0.s8 %v1006
  %v1008 = vlaneseq
  %v1009 = vshrl.u32 %v1008, 7
  %v1010 = vsub.s32 %v1007, %v1009
  %v1011 = vrot.slane %v1003, %v1010
  %1013 = vset.pattern.permute.xlu0 0
  %1014 = vperm.xlu0 %1013, %v881
  %v1015 = vpop.permute.xlu0 %1014
  %v1018 = vunpack.c.l.s4 839922192
  %v1019 = vunpack.c.0.s8 %v1018
  %v1020 = vlaneseq
  %v1021 = vshrl.u32 %v1020, 7
  %v1022 = vsub.s32 %v1019, %v1021
  %v1023 = vrot.slane %v1015, %v1022
  %1025 = vset.pattern.permute.xlu0 0
  %1026 = vperm.xlu0 %1025, %v882
  %v1027 = vpop.permute.xlu0 %1026
  %v1030 = vunpack.c.l.s4 839922192
  %v1031 = vunpack.c.0.s8 %v1030
  %v1032 = vlaneseq
  %v1033 = vshrl.u32 %v1032, 7
  %v1034 = vsub.s32 %v1031, %v1033
  %v1035 = vrot.slane %v1027, %v1034
  %1037 = vset.pattern.permute.xlu0 0
  %1038 = vperm.xlu0 %1037, %v883
  %v1039 = vpop.permute.xlu0 %1038
  %v1042 = vunpack.c.l.s4 839922192
  %v1043 = vunpack.c.0.s8 %v1042
  %v1044 = vlaneseq
  %v1045 = vshrl.u32 %v1044, 7
  %v1046 = vsub.s32 %v1043, %v1045
  %v1047 = vrot.slane %v1039, %v1046
  %1049 = vset.pattern.permute.xlu0 0
  %1050 = vperm.xlu0 %1049, %v884
  %v1051 = vpop.permute.xlu0 %1050
  %v1054 = vunpack.c.l.s4 839922192
  %v1055 = vunpack.c.0.s8 %v1054
  %v1056 = vlaneseq
  %v1057 = vshrl.u32 %v1056, 7
  %v1058 = vsub.s32 %v1055, %v1057
  %v1059 = vrot.slane %v1051, %v1058
  %1061 = vset.pattern.permute.xlu0 0
  %1062 = vperm.xlu0 %1061, %v885
  %v1063 = vpop.permute.xlu0 %1062
  %v1066 = vunpack.c.l.s4 839922192
  %v1067 = vunpack.c.0.s8 %v1066
  %v1068 = vlaneseq
  %v1069 = vshrl.u32 %v1068, 7
  %v1070 = vsub.s32 %v1067, %v1069
  %v1071 = vrot.slane %v1063, %v1070
  %1073 = vset.pattern.permute.xlu0 0
  %1074 = vperm.xlu0 %1073, %v886
  %v1075 = vpop.permute.xlu0 %1074
  %v1078 = vunpack.c.l.s4 839922192
  %v1079 = vunpack.c.0.s8 %v1078
  %v1080 = vlaneseq
  %v1081 = vshrl.u32 %v1080, 7
  %v1082 = vsub.s32 %v1079, %v1081
  %v1083 = vrot.slane %v1075, %v1082
  %1085 = vset.pattern.permute.xlu0 0
  %1086 = vperm.xlu0 %1085, %v887
  %v1087 = vpop.permute.xlu0 %1086
  %v1090 = vunpack.c.l.s4 839922192
  %v1091 = vunpack.c.0.s8 %v1090
  %v1092 = vlaneseq
  %v1093 = vshrl.u32 %v1092, 7
  %v1094 = vsub.s32 %v1091, %v1093
  %v1095 = vrot.slane %v1087, %v1094
  %1097 = vset.pattern.permute.xlu0 0
  %1098 = vperm.xlu0 %1097, %v888
  %v1099 = vpop.permute.xlu0 %1098
  %v1102 = vunpack.c.l.s4 839922192
  %v1103 = vunpack.c.0.s8 %v1102
  %v1104 = vlaneseq
  %v1105 = vshrl.u32 %v1104, 7
  %v1106 = vsub.s32 %v1103, %v1105
  %v1107 = vrot.slane %v1099, %v1106
  %1109 = vset.pattern.permute.xlu0 0
  %1110 = vperm.xlu0 %1109, %v889
  %v1111 = vpop.permute.xlu0 %1110
  %v1114 = vunpack.c.l.s4 839922192
  %v1115 = vunpack.c.0.s8 %v1114
  %v1116 = vlaneseq
  %v1117 = vshrl.u32 %v1116, 7
  %v1118 = vsub.s32 %v1115, %v1117
  %v1119 = vrot.slane %v1111, %v1118
  %1121 = vset.pattern.permute.xlu0 0
  %1122 = vperm.xlu0 %1121, %v890
  %v1123 = vpop.permute.xlu0 %1122
  %v1126 = vunpack.c.l.s4 839922192
  %v1127 = vunpack.c.0.s8 %v1126
  %v1128 = vlaneseq
  %v1129 = vshrl.u32 %v1128, 7
  %v1130 = vsub.s32 %v1127, %v1129
  %v1131 = vrot.slane %v1123, %v1130
  %1133 = vset.pattern.permute.xlu0 0
  %1134 = vperm.xlu0 %1133, %v891
  %v1135 = vpop.permute.xlu0 %1134
  %v1138 = vunpack.c.l.s4 839922192
  %v1139 = vunpack.c.0.s8 %v1138
  %v1140 = vlaneseq
  %v1141 = vshrl.u32 %v1140, 7
  %v1142 = vsub.s32 %v1139, %v1141
  %v1143 = vrot.slane %v1135, %v1142
  %1145 = vset.pattern.permute.xlu0 0
  %1146 = vperm.xlu0 %1145, %v892
  %v1147 = vpop.permute.xlu0 %1146
  %v1150 = vunpack.c.l.s4 839922192
  %v1151 = vunpack.c.0.s8 %v1150
  %v1152 = vlaneseq
  %v1153 = vshrl.u32 %v1152, 7
  %v1154 = vsub.s32 %v1151, %v1153
  %v1155 = vrot.slane %v1147, %v1154
  %1157 = vset.pattern.permute.xlu0 0
  %1158 = vperm.xlu0 %1157, %v893
  %v1159 = vpop.permute.xlu0 %1158
  %v1162 = vunpack.c.l.s4 839922192
  %v1163 = vunpack.c.0.s8 %v1162
  %v1164 = vlaneseq
  %v1165 = vshrl.u32 %v1164, 7
  %v1166 = vsub.s32 %v1163, %v1165
  %v1167 = vrot.slane %v1159, %v1166
  %1169 = vset.pattern.permute.xlu0 0
  %1170 = vperm.xlu0 %1169, %v894
  %v1171 = vpop.permute.xlu0 %1170
  %v1174 = vunpack.c.l.s4 839922192
  %v1175 = vunpack.c.0.s8 %v1174
  %v1176 = vlaneseq
  %v1177 = vshrl.u32 %v1176, 7
  %v1178 = vsub.s32 %v1175, %v1177
  %v1179 = vrot.slane %v1171, %v1178
  %1181 = vset.pattern.permute.xlu0 0
  %1182 = vperm.xlu0 %1181, %v895
  %v1183 = vpop.permute.xlu0 %1182
  %v1186 = vunpack.c.l.s4 839922192
  %v1187 = vunpack.c.0.s8 %v1186
  %v1188 = vlaneseq
  %v1189 = vshrl.u32 %v1188, 7
  %v1190 = vsub.s32 %v1187, %v1189
  %v1191 = vrot.slane %v1183, %v1190
  %1193 = vset.pattern.permute.xlu0 0
  %1194 = vperm.xlu0 %1193, %v896
  %v1195 = vpop.permute.xlu0 %1194
  %v1198 = vunpack.c.l.s4 839922192
  %v1199 = vunpack.c.0.s8 %v1198
  %v1200 = vlaneseq
  %v1201 = vshrl.u32 %v1200, 7
  %v1202 = vsub.s32 %v1199, %v1201
  %v1203 = vrot.slane %v1195, %v1202
  %1205 = vset.pattern.permute.xlu0 0
  %1206 = vperm.xlu0 %1205, %v897
  %v1207 = vpop.permute.xlu0 %1206
  %v1210 = vunpack.c.l.s4 839922192
  %v1211 = vunpack.c.0.s8 %v1210
  %v1212 = vlaneseq
  %v1213 = vshrl.u32 %v1212, 7
  %v1214 = vsub.s32 %v1211, %v1213
  %v1215 = vrot.slane %v1207, %v1214
  %1217 = vset.pattern.permute.xlu0 0
  %1218 = vperm.xlu0 %1217, %v898
  %v1219 = vpop.permute.xlu0 %1218
  %v1222 = vunpack.c.l.s4 839922192
  %v1223 = vunpack.c.0.s8 %v1222
  %v1224 = vlaneseq
  %v1225 = vshrl.u32 %v1224, 7
  %v1226 = vsub.s32 %v1223, %v1225
  %v1227 = vrot.slane %v1219, %v1226
  %1229 = vset.pattern.permute.xlu0 0
  %1230 = vperm.xlu0 %1229, %v899
  %v1231 = vpop.permute.xlu0 %1230
  %v1234 = vunpack.c.l.s4 839922192
  %v1235 = vunpack.c.0.s8 %v1234
  %v1236 = vlaneseq
  %v1237 = vshrl.u32 %v1236, 7
  %v1238 = vsub.s32 %v1235, %v1237
  %v1239 = vrot.slane %v1231, %v1238
  %1241 = vset.pattern.permute.xlu0 0
  %1242 = vperm.xlu0 %1241, %v900
  %v1243 = vpop.permute.xlu0 %1242
  %v1246 = vunpack.c.l.s4 839922192
  %v1247 = vunpack.c.0.s8 %v1246
  %v1248 = vlaneseq
  %v1249 = vshrl.u32 %v1248, 7
  %v1250 = vsub.s32 %v1247, %v1249
  %v1251 = vrot.slane %v1243, %v1250
  %1253 = vset.pattern.permute.xlu0 0
  %1254 = vperm.xlu0 %1253, %v901
  %v1255 = vpop.permute.xlu0 %1254
  %v1258 = vunpack.c.l.s4 839922192
  %v1259 = vunpack.c.0.s8 %v1258
  %v1260 = vlaneseq
  %v1261 = vshrl.u32 %v1260, 7
  %v1262 = vsub.s32 %v1259, %v1261
  %v1263 = vrot.slane %v1255, %v1262
  %1265 = vset.pattern.permute.xlu0 0
  %1266 = vperm.xlu0 %1265, %v902
  %v1267 = vpop.permute.xlu0 %1266
  %v1270 = vunpack.c.l.s4 839922192
  %v1271 = vunpack.c.0.s8 %v1270
  %v1272 = vlaneseq
  %v1273 = vshrl.u32 %v1272, 7
  %v1274 = vsub.s32 %v1271, %v1273
  %v1275 = vrot.slane %v1267, %v1274
  %1277 = vset.pattern.permute.xlu0 0
  %1278 = vperm.xlu0 %1277, %v903
  %v1279 = vpop.permute.xlu0 %1278
  %v1282 = vunpack.c.l.s4 839922192
  %v1283 = vunpack.c.0.s8 %v1282
  %v1284 = vlaneseq
  %v1285 = vshrl.u32 %v1284, 7
  %v1286 = vsub.s32 %v1283, %v1285
  %v1287 = vrot.slane %v1279, %v1286
  %v1320 = vunpack.c.l.b16 %v915
  %v1321 = vunpack.c.l.b16 %v927
  %v1322 = vunpack.c.l.b16 %v939
  %v1323 = vunpack.c.l.b16 %v951
  %v1324 = vunpack.c.l.b16 %v963
  %v1325 = vunpack.c.l.b16 %v975
  %v1326 = vunpack.c.l.b16 %v987
  %v1327 = vunpack.c.l.b16 %v999
  %v1328 = vunpack.c.l.b16 %v1011
  %v1329 = vunpack.c.l.b16 %v1023
  %v1330 = vunpack.c.l.b16 %v1035
  %v1331 = vunpack.c.l.b16 %v1047
  %v1332 = vunpack.c.l.b16 %v1059
  %v1333 = vunpack.c.l.b16 %v1071
  %v1334 = vunpack.c.l.b16 %v1083
  %v1335 = vunpack.c.l.b16 %v1095
  %v1336 = vunpack.c.l.b16 %v1107
  %v1337 = vunpack.c.l.b16 %v1119
  %v1338 = vunpack.c.l.b16 %v1131
  %v1339 = vunpack.c.l.b16 %v1143
  %v1340 = vunpack.c.l.b16 %v1155
  %v1341 = vunpack.c.l.b16 %v1167
  %v1342 = vunpack.c.l.b16 %v1179
  %v1343 = vunpack.c.l.b16 %v1191
  %v1344 = vunpack.c.l.b16 %v1203
  %v1345 = vunpack.c.l.b16 %v1215
  %v1346 = vunpack.c.l.b16 %v1227
  %v1347 = vunpack.c.l.b16 %v1239
  %v1348 = vunpack.c.l.b16 %v1251
  %v1349 = vunpack.c.l.b16 %v1263
  %v1350 = vunpack.c.l.b16 %v1275
  %v1351 = vunpack.c.l.b16 %v1287
  %v1352 = vpack.c.b16 %v1321, %v1320
  %v1353 = vpack.c.b16 %v1323, %v1322
  %v1354 = vpack.c.b16 %v1325, %v1324
  %v1355 = vpack.c.b16 %v1327, %v1326
  %v1356 = vpack.c.b16 %v1329, %v1328
  %v1357 = vpack.c.b16 %v1331, %v1330
  %v1358 = vpack.c.b16 %v1333, %v1332
  %v1359 = vpack.c.b16 %v1335, %v1334
  %v1360 = vpack.c.b16 %v1337, %v1336
  %v1361 = vpack.c.b16 %v1339, %v1338
  %v1362 = vpack.c.b16 %v1341, %v1340
  %v1363 = vpack.c.b16 %v1343, %v1342
  %v1364 = vpack.c.b16 %v1345, %v1344
  %v1365 = vpack.c.b16 %v1347, %v1346
  %v1366 = vpack.c.b16 %v1349, %v1348
  %v1367 = vpack.c.b16 %v1351, %v1350
  %v1384 = vadd.bf16 %v840, %v1352
  %v1385 = vadd.bf16 %v841, %v1352
  %v1386 = vadd.bf16 %v842, %v1353
  %v1387 = vadd.bf16 %v843, %v1353
  %v1388 = vadd.bf16 %v844, %v1354
  %v1389 = vadd.bf16 %v845, %v1354
  %v1390 = vadd.bf16 %v846, %v1355
  %v1391 = vadd.bf16 %v847, %v1355
  %v1392 = vadd.bf16 %v848, %v1356
  %v1393 = vadd.bf16 %v849, %v1356
  %v1394 = vadd.bf16 %v850, %v1357
  %v1395 = vadd.bf16 %v851, %v1357
  %v1396 = vadd.bf16 %v852, %v1358
  %v1397 = vadd.bf16 %v853, %v1358
  %v1398 = vadd.bf16 %v854, %v1359
  %v1399 = vadd.bf16 %v855, %v1359
  %v1400 = vadd.bf16 %v856, %v1360
  %v1401 = vadd.bf16 %v857, %v1360
  %v1402 = vadd.bf16 %v858, %v1361
  %v1403 = vadd.bf16 %v859, %v1361
  %v1404 = vadd.bf16 %v860, %v1362
  %v1405 = vadd.bf16 %v861, %v1362
  %v1406 = vadd.bf16 %v862, %v1363
  %v1407 = vadd.bf16 %v863, %v1363
  %v1408 = vadd.bf16 %v864, %v1364
  %v1409 = vadd.bf16 %v865, %v1364
  %v1410 = vadd.bf16 %v866, %v1365
  %v1411 = vadd.bf16 %v867, %v1365
  %v1412 = vadd.bf16 %v868, %v1366
  %v1413 = vadd.bf16 %v869, %v1366
  %v1414 = vadd.bf16 %v870, %v1367
  %v1415 = vadd.bf16 %v871, %v1367
  %v1416 = vmax.bf16 %v1384, 0
  %v1417 = vmax.bf16 %v1385, 0
  %v1418 = vmax.bf16 %v1386, 0
  %v1419 = vmax.bf16 %v1387, 0
  %v1420 = vmax.bf16 %v1388, 0
  %v1421 = vmax.bf16 %v1389, 0
  %v1422 = vmax.bf16 %v1390, 0
  %v1423 = vmax.bf16 %v1391, 0
  %v1424 = vmax.bf16 %v1392, 0
  %v1425 = vmax.bf16 %v1393, 0
  %v1426 = vmax.bf16 %v1394, 0
  %v1427 = vmax.bf16 %v1395, 0
  %v1428 = vmax.bf16 %v1396, 0
  %v1429 = vmax.bf16 %v1397, 0
  %v1430 = vmax.bf16 %v1398, 0
  %v1431 = vmax.bf16 %v1399, 0
  %v1432 = vmax.bf16 %v1400, 0
  %v1433 = vmax.bf16 %v1401, 0
  %v1434 = vmax.bf16 %v1402, 0
  %v1435 = vmax.bf16 %v1403, 0
  %v1436 = vmax.bf16 %v1404, 0
  %v1437 = vmax.bf16 %v1405, 0
  %v1438 = vmax.bf16 %v1406, 0
  %v1439 = vmax.bf16 %v1407, 0
  %v1440 = vmax.bf16 %v1408, 0
  %v1441 = vmax.bf16 %v1409, 0
  %v1442 = vmax.bf16 %v1410, 0
  %v1443 = vmax.bf16 %v1411, 0
  %v1444 = vmax.bf16 %v1412, 0
  %v1445 = vmax.bf16 %v1413, 0
  %v1446 = vmax.bf16 %v1414, 0
  %v1447 = vmax.bf16 %v1415, 0
  %v1448 = vld [vmem:[%s5] sm:$0xff]
  %v1450 = vunpack.c.l.b16 %v1448
  %v1451 = vunpack.c.h.b16 %v1448
  %v1452 = vpack.c.b16 %v1450, %v1450
  %v1453 = vpack.c.b16 %v1451, %v1451
  %1456 = vmatprep.subr.bf16.mxu0 %v1431
  %1457 = vmatpush1.bf16.msra.mxu0 %v1430
  %1458 = vmatprep.subr.bf16.mxu0 %v1429
  %1459 = vmatpush1.bf16.msra.mxu0 %v1428
  %1460 = vmatprep.subr.bf16.mxu0 %v1427
  %1461 = vmatpush1.bf16.msra.mxu0 %v1426
  %1462 = vmatprep.subr.bf16.mxu0 %v1425
  %1463 = vmatpush1.bf16.msra.mxu0 %v1424
  %1464 = vmatprep.subr.bf16.mxu0 %v1423
  %1465 = vmatpush1.bf16.msra.mxu0 %v1422
  %1466 = vmatprep.subr.bf16.mxu0 %v1421
  %1467 = vmatpush1.bf16.msra.mxu0 %v1420
  %1468 = vmatprep.subr.bf16.mxu0 %v1419
  %1469 = vmatpush1.bf16.msra.mxu0 %v1418
  %1470 = vmatprep.subr.bf16.mxu0 %v1417
  %1471 = vmatpush1.bf16.msra.mxu0 %v1416
  %1472 = vmatprep.subr.bf16.mxu0 %v1447
  %1473 = vmatpush2.bf16.msra.mxu0 %v1446
  %1474 = vmatprep.subr.bf16.mxu0 %v1445
  %1475 = vmatpush2.bf16.msra.mxu0 %v1444
  %1476 = vmatprep.subr.bf16.mxu0 %v1443
  %1477 = vmatpush2.bf16.msra.mxu0 %v1442
  %1478 = vmatprep.subr.bf16.mxu0 %v1441
  %1479 = vmatpush2.bf16.msra.mxu0 %v1440
  %1480 = vmatprep.subr.bf16.mxu0 %v1439
  %1481 = vmatpush2.bf16.msra.mxu0 %v1438
  %1482 = vmatprep.subr.bf16.mxu0 %v1437
  %1483 = vmatpush2.bf16.msra.mxu0 %v1436
  %1484 = vmatprep.subr.bf16.mxu0 %v1435
  %1485 = vmatpush2.bf16.msra.mxu0 %v1434
  %1486 = vmatprep.subr.bf16.mxu0 %v1433
  %1487 = vmatpush2.bf16.msra.mxu0 %v1432
  %1488 = vmatprep.mubr.bf16.mxu0 %v1453
  %1489 = vmatmul.mubr.bf16.gmra.mxu0 %v1452
  %v1490 = vpop.f32.mrf.mxu0
  %v1491 = vadd.f32 0.0, %v1490
  %v1492 = vpop.f32.mrf.mxu0
  %v1493 = vadd.f32 0.0, %v1492
  %v1494 = vpop.f32.mrf.mxu0
  %v1495 = vpop.f32.mrf.mxu0
  %1496 = vdwg.mxu0
  %s1497 = sld [smem:[#allocation2]]
  %v1498 = vstv %s1497
  %v1499 = vadd.f32 %v1491, %v1498
  %v1500 = vadd.f32 %v1493, %v1498
  %v1503 = vcombine.low %v1499, %v1500
  %v1505 = vunpack.c.l.s4 1966171168
  %v1506 = vunpack.c.0.s8 %v1505
  %v1507 = vlaneseq
  %v1508 = vshrl.u32 %v1507, 7
  %v1509 = vsub.s32 %v1506, %v1508
  %v1510 = vrot.slane %v1503, %v1509
  %v1512 = vunpack.c.l.s4 1966171168
  %v1513 = vunpack.c.0.s8 %v1512
  %v1514 = vlaneseq
  %v1515 = vshrl.u32 %v1514, 7
  %v1516 = vsub.s32 %v1513, %v1515
  %v1517 = vrot.slane %v1510, %v1516
  %v1519 = vlaneseq
  %vm1520 = vcmp.ge.s32.totalorder %v1519, 0
  %vm1521 = vcmp.lt.s32.totalorder %v1519, 256
  %vm1522 = vmand %vm1520, %vm1521
  %1523 = vst.msk [vmem:[%s6] sm:$0x3] %vm1522, %v1517
  // Predicated region
  $region26: #{critic_forward.1} parent=0 // pred_check
    _
  $region27: #{critic_forward.1} parent=0 // pred_check_branch
    %1525 = sbr.rel (0) target = $region29
  $region28: #{critic_forward.1} parent=0 // pred_region
    _
  $region29: #{critic_forward.1} parent=0 // pred_fallthru
    _
  // Predicated region
  $region30: #{critic_forward.1} parent=0 // pred_check
    _
  $region31: #{critic_forward.1} parent=0 // pred_check_branch
    %1527 = sbr.rel (0) target = $region33
  $region32: #{critic_forward.1} parent=0 // pred_region
    _
  $region33: #{critic_forward.1} parent=0 // pred_fallthru
    _

</llo_original>
